<compile_context>
chip_gen: v5e
topology: v5e:2x2
jax: 0.10.0
libtpu: 0.0.40
codegen_flags: <defaults>
</compile_context>

<pallas_src>
import functools

import jax
import jax.numpy as jnp
from jax.experimental import pallas as pl
from jax.experimental.pallas import tpu as pltpu

_LANE = 128
_SUBLANE = 8
_MAX_TILE_ROWS = 4096  # 4096 x 128 x 4 B = 2 MiB per pipeline buffer


def _cdiv(a, b):
    return -(-a // b)


def _round_up(a, b):
    return _cdiv(a, b) * b


def _clip_boxes_kernel(x_ref, o_ref, *, width, height):
    # x_ref / o_ref: (tile_rows, 128) VMEM tiles of the flattened boxes.
    x = x_ref[...]
    dt = x.dtype

    # Per-lane coordinate id (0..3): constant (1, 128) pattern, hoisted and
    # broadcast over sublanes inside max/min.
    lane = jax.lax.broadcasted_iota(jnp.int32, (1, x.shape[1]), 1)
    coord = lane % 4

    # NOTE: bounds are cast to the boxes dtype (matches torch.clamp semantics;
    # for bf16 boxes the bound itself rounds, e.g. width=1333 -> 1336).
    lo = jnp.where(coord < 2, jnp.asarray(0.0, dt), jnp.asarray(-jnp.inf, dt))
    hi = jnp.where(
        coord == 2,
        jnp.asarray(width, dt),
        jnp.where(coord == 3, jnp.asarray(height, dt), jnp.asarray(jnp.inf, dt)),
    )
    o_ref[...] = jnp.minimum(jnp.maximum(x, lo), hi).astype(o_ref.dtype)


def _clip_boxes_impl(boxes, img):
    """Pallas equivalent of ClipBoxes.forward(boxes, img)."""
    _, _, height, width = img.shape  # NCHW, shape-only use
    B, N, C4 = boxes.shape
    assert C4 == 4, "boxes last dim must be 4 (x1, y1, x2, y2)"
    assert jnp.issubdtype(boxes.dtype, jnp.floating), "boxes must be floating point"

    total = B * N * 4
    rows = _cdiv(total, _LANE)
    padded_total = rows * _LANE
    no_pad = padded_total == total

    if rows < 2 * _SUBLANE:
        # Tiny input: single full-extent block (block dim == array dim is legal
        # even when not a multiple of 8).
        tile_rows = rows
    else:
        # >= 2 grid steps so the "parallel" axis shards across v7x's 2 TCs;
        # cap at _MAX_TILE_ROWS.  Ragged final block is masked by Pallas.
        tile_rows = min(_MAX_TILE_ROWS, _round_up(_cdiv(rows, 2), _SUBLANE))
    grid_rows = _cdiv(rows, tile_rows)

    if no_pad:
        flat2d = boxes.reshape(rows, _LANE)  # pure bitcast view
    else:
        flat2d = jnp.pad(boxes.reshape(-1), (0, padded_total - total)).reshape(
            rows, _LANE
        )

    itemsize = jnp.dtype(boxes.dtype).itemsize
    kernel = functools.partial(_clip_boxes_kernel, width=width, height=height)
    out2d = pl.pallas_call(
        kernel,
        out_shape=jax.ShapeDtypeStruct((rows, _LANE), boxes.dtype),
        grid_spec=pltpu.PrefetchScalarGridSpec(
            num_scalar_prefetch=0,
            grid=(grid_rows,),
            in_specs=[pl.BlockSpec((tile_rows, _LANE), lambda i: (i, 0))],
            out_specs=pl.BlockSpec((tile_rows, _LANE), lambda i: (i, 0)),
        ),
        compiler_params=pltpu.CompilerParams(
            dimension_semantics=("parallel",),
        ),
        cost_estimate=pl.CostEstimate(
            flops=2 * padded_total,
            transcendentals=0,
            bytes_accessed=2 * padded_total * itemsize,
        ),
        input_output_aliases={0: 0},
    )(flat2d)

    if no_pad:
        return out2d.reshape(B, N, 4)  # pure bitcast view
    return out2d.reshape(-1)[:total].reshape(B, N, 4)


# Donate `boxes` so the in-place behavior of the PyTorch module is real: the
# pallas alias then writes straight into the caller's HBM buffer on the
# no-pad fast path (no defensive copy).
clip_boxes = jax.jit(_clip_boxes_impl, donate_argnums=0)


def _clip_boxes_ref(boxes, img):
    # Pure-JAX reference mirroring the PyTorch module.
    _, _, height, width = img.shape
    x1 = jnp.maximum(boxes[:, :, 0], 0.0)
    y1 = jnp.maximum(boxes[:, :, 1], 0.0)
    x2 = jnp.minimum(boxes[:, :, 2], float(width))
    y2 = jnp.minimum(boxes[:, :, 3], float(height))
    return jnp.stack([x1, y1, x2, y2], axis=-1)


if __name__ == "__main__":
    key = jax.random.PRNGKey(0)
    kb, ki, kb2 = jax.random.split(key, 3)

    # Small shapes consistent with the module (exercises the pad path:
    # total = 64 elements < one lane row).
    B, N = 2, 8
    C, H, W = 4, 16, 16
    boxes = jax.random.uniform(
        kb, (B, N, 4), dtype=jnp.float32, minval=-10.0, maxval=30.0
    )
    img = jax.random.normal(ki, (B, C, H, W), dtype=jnp.float32)

    # Reference first: `boxes` is donated by clip_boxes.
    ref = jax.block_until_ready(_clip_boxes_ref(boxes, img))
    out = clip_boxes(boxes, img)
    jax.block_until_ready(out)
    assert out.shape == ref.shape and out.dtype == ref.dtype
    assert jnp.array_equal(out, ref), "mismatch vs reference (small)"

    # Larger case: no-pad fast path (total % 128 == 0), 2-step parallel grid,
    # ragged final block (rows = 1250, tile_rows = 632).
    B2, N2 = 2, 20000
    boxes2 = jax.random.uniform(
        kb2, (B2, N2, 4), dtype=jnp.float32, minval=-50.0, maxval=80.0
    )
    img2 = jnp.zeros((B2, C, 37, 53), dtype=jnp.float32)
    ref2 = jax.block_until_ready(_clip_boxes_ref(boxes2, img2))
    out2 = clip_boxes(boxes2, img2)
    jax.block_until_ready(out2)
    assert jnp.array_equal(out2, ref2), "mismatch vs reference (large)"

    print("KERNEL_OK")
</pallas_src>

<mosaic_0001>
module attributes {stable_mosaic.version = 11 : i64} {
  func.func @_clip_boxes_kernel(%arg0: i32, %arg1: memref<1x128xf32, #tpu.memory_space<vmem>>, %arg2: memref<1x128xf32, #tpu.memory_space<vmem>>) attributes {dimension_semantics = [#tpu.dimension_semantics<parallel>], iteration_bounds = array<i64: 1>, scalar_prefetch = 0 : i64, scratch_operands = 0 : i64, tpu.core_type = #tpu.core_type<tc>, window_params = [{transform_indices = @transform_0, window_bounds = array<i64: 1, 128>}, {transform_indices = @transform_1, window_bounds = array<i64: 1, 128>}]} {
    %c0 = arith.constant 0 : index
    %c0_0 = arith.constant 0 : index
    %0 = vector.load %arg1[%c0, %c0_0] : memref<1x128xf32, #tpu.memory_space<vmem>>, vector<1x128xf32>
    %1 = tpu.iota {dimensions = array<i32: 1>} : vector<1x128xi32>
    %c4_i32 = arith.constant 4 : i32
    %c0_i32 = arith.constant 0 : i32
    %2 = arith.cmpi eq, %c4_i32, %c0_i32 : i32
    %c1_i32 = arith.constant 1 : i32
    %3 = arith.select %2, %c1_i32, %c4_i32 : i32
    %4 = vector.broadcast %3 : i32 to vector<1x128xi32>
    %5 = arith.remsi %1, %4 : vector<1x128xi32>
    %c0_i32_1 = arith.constant 0 : i32
    %6 = vector.broadcast %c0_i32_1 : i32 to vector<1x128xi32>
    %7 = arith.cmpi ne, %5, %6 : vector<1x128xi32>
    %c0_i32_2 = arith.constant 0 : i32
    %8 = vector.broadcast %c0_i32_2 : i32 to vector<1x128xi32>
    %9 = arith.cmpi slt, %5, %8 : vector<1x128xi32>
    %c0_i32_3 = arith.constant 0 : i32
    %10 = arith.cmpi slt, %3, %c0_i32_3 : i32
    %11 = vector.broadcast %10 : i1 to vector<1x128xi1>
    %12 = vector.broadcast %11 : vector<1x128xi1> to vector<1x128xi1>
    %13 = arith.xori %9, %12 : vector<1x128xi1>
    %14 = arith.andi %13, %7 : vector<1x128xi1>
    %15 = vector.broadcast %3 : i32 to vector<1x128xi32>
    %16 = arith.addi %5, %15 : vector<1x128xi32>
    %17 = arith.select %14, %16, %5 : vector<1x128xi1>, vector<1x128xi32>
    %c2_i32 = arith.constant 2 : i32
    %18 = vector.broadcast %c2_i32 : i32 to vector<1x128xi32>
    %19 = arith.cmpi slt, %17, %18 : vector<1x128xi32>
    %cst = arith.constant 0.000000e+00 : f32
    %cst_4 = arith.constant 0xFF800000 : f32
    %20 = vector.broadcast %cst : f32 to vector<1x128xf32>
    %21 = vector.broadcast %cst_4 : f32 to vector<1x128xf32>
    %22 = arith.select %19, %20, %21 : vector<1x128xi1>, vector<1x128xf32>
    %c2_i32_5 = arith.constant 2 : i32
    %23 = vector.broadcast %c2_i32_5 : i32 to vector<1x128xi32>
    %24 = arith.cmpi eq, %17, %23 : vector<1x128xi32>
    %c3_i32 = arith.constant 3 : i32
    %25 = vector.broadcast %c3_i32 : i32 to vector<1x128xi32>
    %26 = arith.cmpi eq, %17, %25 : vector<1x128xi32>
    %cst_6 = arith.constant 1.600000e+01 : f32
    %cst_7 = arith.constant 0x7F800000 : f32
    %27 = vector.broadcast %cst_6 : f32 to vector<1x128xf32>
    %28 = vector.broadcast %cst_7 : f32 to vector<1x128xf32>
    %29 = arith.select %26, %27, %28 : vector<1x128xi1>, vector<1x128xf32>
    %cst_8 = arith.constant 1.600000e+01 : f32
    %30 = vector.broadcast %cst_8 : f32 to vector<1x128xf32>
    %31 = arith.select %24, %30, %29 : vector<1x128xi1>, vector<1x128xf32>
    %32 = arith.maximumf %0, %22 : vector<1x128xf32>
    %33 = arith.minimumf %32, %31 : vector<1x128xf32>
    %c0_9 = arith.constant 0 : index
    %c0_10 = arith.constant 0 : index
    %34 = vector.load %arg2[%c0_9, %c0_10] : memref<1x128xf32, #tpu.memory_space<vmem>>, vector<1x128xf32>
    tpu.vector_store %arg2[%c0_9, %c0_10], %33 {strides = array<i32>} : memref<1x128xf32, #tpu.memory_space<vmem>>, vector<1x128xf32>,
    return
  }
  func.func @transform_0(%arg0: i32) -> (i32, i32) {
    %c0_i32 = arith.constant 0 : i32
    %c0_i32_0 = arith.constant 0 : i32
    return %arg0, %c0_i32 : i32, i32
  }
  func.func @transform_1(%arg0: i32) -> (i32, i32) {
    %c0_i32 = arith.constant 0 : i32
    %c0_i32_0 = arith.constant 0 : i32
    return %arg0, %c0_i32 : i32, i32
  }
}

</mosaic_0001>

<llo_original>
// kernel: _clip_boxes_impl.1
$region0: #{_clip_boxes_impl.1}
  #allocation0 [shape = 'u32[]', space=smem, size = 0x4, offset = 0x4, fixed_abs, tag = 'smem constant byte address 0x4 - core index']
  #allocation1 [shape = 'u32[72,128]{1,0:T(1,128)}', space=vmem, size = 0x9000, scoped, tag = 'internal scratch']
  %s0 = inlined_call_operand.vmem [shape: f32[1,128], index: 0, kind: input, shape index: {}, may-alias: {0,1}]
  %s1 = inlined_call_operand.vmem [shape: f32[1,128], index: 1, kind: output, shape index: {}, may-alias: {0,1}]
  %s2 = sld [smem:[#allocation0]]
  $region14: #{_clip_boxes_impl.1} parent=0
    _
  %s4 = ssub.s32 1, %s2
  %s5 = scalar_select 0, %s4, %s2
  // Predicated region
  $region2: #{_clip_boxes_impl.1} parent=0 // pred_check
    _
  $region3: #{_clip_boxes_impl.1} parent=0 // pred_check_branch
    %7 = sbr.rel (0) target = $region5
  $region4: #{_clip_boxes_impl.1} parent=0 // pred_region
    _
  $region5: #{_clip_boxes_impl.1} parent=0 // pred_fallthru
    _
  %v8 = vld [vmem:[%s0] sm:$0x1]
  %v9 = vlaneseq
  %v10 = vand.u32 %v9, 127
  %vm11 = vcmp.lt.s32.totalorder %v10, 0
  %v12 = vsub.s32 0, %v10
  %v13 = vsel %vm11, %v12, %v10
  %v14 = vshrl.u32 %v13, 2
  %v15 = vand.u32 %v13, 3
  %v16 = vsub.s32 0, %v15
  %v17 = vsel %vm11, %v16, %v15
  %vm18 = vcmp.ne.s32.totalorder %v17, 0
  %vm19 = vcmp.lt.s32.totalorder %v17, 0
  %vm20 = vmand %vm19, %vm18
  %v21 = vadd.s32 %v17, 4
  %v22 = vsel %vm20, %v21, %v17
  %vm23 = vcmp.lt.s32.totalorder %v22, 2
  %v24 = vsel %vm23, 0.0, -inf
  %vm25 = vcmp.eq.s32.totalorder %v22, 2
  %vm26 = vcmp.eq.s32.totalorder %v22, 3
  %v27 = vsel %vm26, 16.0, inf
  %v28 = vsel %vm25, 16.0, %v27
  %v29 = vmax.f32 %v8, %v24
  %v30 = vmin.f32 %v29, %v28
  %31 = vst [vmem:[%s1] sm:$0x1] %v30
  // Predicated region
  $region6: #{_clip_boxes_impl.1} parent=0 // pred_check
    _
  $region7: #{_clip_boxes_impl.1} parent=0 // pred_check_branch
    %33 = sbr.rel (0) target = $region9
  $region8: #{_clip_boxes_impl.1} parent=0 // pred_region
    _
  $region9: #{_clip_boxes_impl.1} parent=0 // pred_fallthru
    _
  // Predicated region
  $region10: #{_clip_boxes_impl.1} parent=0 // pred_check
    _
  $region11: #{_clip_boxes_impl.1} parent=0 // pred_check_branch
    %35 = sbr.rel (0) target = $region13
  $region12: #{_clip_boxes_impl.1} parent=0 // pred_region
    _
  $region13: #{_clip_boxes_impl.1} parent=0 // pred_fallthru
    _

</llo_original>
